<compile_context>
chip_gen: v6e
topology: v6e:2x2x1
jax: 0.10.0
libtpu: 0.0.40
codegen_flags: <defaults>
</compile_context>

<pallas_src>
import functools
import math

import jax
import jax.numpy as jnp
import numpy as np
from jax.experimental import pallas as pl
from jax.experimental.pallas import tpu as pltpu


_TILE_BUDGET_BYTES = 30 * 1024 * 1024   # accounted per-tile working set
_VMEM_LIMIT_BYTES = 48 * 1024 * 1024    # scoped VMEM limit handed to Mosaic


def _cheb_gcn_kernel(x_ref, gsoT_ref, wT_ref, b_ref, o_ref, xk_ref,
                     *, Ks, BT_TILE, C, N, cdtype):
    """One (b, t)-tile of ChebGraphConv + bias + residual.

    x_ref:    (BT_TILE, C, N)     activation block (also residual / order-0 term)
    gsoT_ref: (N, N)              transposed graph shift operator (compute dtype)
    wT_ref:   (C, Ks*C)           fused weight: wT[j, k*C+i] = weight[k, i, j]
    b_ref:    (C, N)              lane-dense bias (f32)
    o_ref:    (BT_TILE, C, N)     output block
    xk_ref:   (BT_TILE, Ks*C, N)  f32 scratch holding all Chebyshev terms
    """
    gso_t = gsoT_ref[...]

    x0 = x_ref[...].astype(jnp.float32)          # (BT_TILE, C, N)
    xk_ref[:, 0:C, :] = x0

    # Chebyshev recursion (vertex mixing): one lane-dense 2-D MXU matmul per
    # order, batched over every (b, t, c) row of the tile (M = BT_TILE*C).
    # Terms are kept in f32 in the scratch; only the MXU operands are cast.
    if Ks >= 2:
        x1 = jnp.dot(x0.reshape(BT_TILE * C, N).astype(cdtype), gso_t,
                     preferred_element_type=jnp.float32)
        xk_ref[:, C:2 * C, :] = x1.reshape(BT_TILE, C, N)
        for k in range(2, Ks):
            x_prev = xk_ref[:, (k - 1) * C:k * C, :].reshape(BT_TILE * C, N)
            x_prev2 = xk_ref[:, (k - 2) * C:(k - 1) * C, :]
            t = jnp.dot(x_prev.astype(cdtype), gso_t,
                        preferred_element_type=jnp.float32)
            xk_ref[:, k * C:(k + 1) * C, :] = (
                2.0 * t.reshape(BT_TILE, C, N) - x_prev2)

    # Fused channel contraction over all Ks orders at once (K = Ks*C on the
    # MXU), batched over the bt slabs of the tile.  The broadcast weight is
    # compute-dtype and charged to the VMEM budget in the tile picker.
    w_b = jnp.broadcast_to(wT_ref[...][None, :, :], (BT_TILE, C, Ks * C))
    acc = jax.lax.dot_general(
        w_b, xk_ref[...].astype(cdtype),
        dimension_numbers=(((2,), (1,)), ((0,), (0,))),
        preferred_element_type=jnp.float32)          # (BT_TILE, C, N)

    acc = acc + b_ref[...][None, :, :]               # bias, lane-dense VPU add
    acc = acc + x0                                   # residual (c_out == C)
    o_ref[...] = acc.astype(o_ref.dtype)


def _tensorcores_per_chip():
    """Best-effort detection of TensorCores per chip (v7x has 2)."""
    try:
        kind = (jax.devices()[0].device_kind or "").lower()
        if "v7" in kind:
            return 2
    except Exception:
        pass
    return 1


def _pick_bt_tile(BT, C, N, Ks, in_bytes, out_bytes, cd_bytes,
                  budget_bytes=_TILE_BUDGET_BYTES, step_multiple=1):
    """Largest (b, t)-tile whose accounted working set fits the budget."""

    def tile_bytes(tb):
        slab_f32 = tb * C * N * 4
        cheb_scratch = Ks * slab_f32                   # f32 Chebyshev terms
        cheb_cd = Ks * tb * C * N * cd_bytes           # compute-dtype copy -> MXU
        transient = 3 * slab_f32                       # x0 / matmul result / acc
        w_bcast = tb * C * Ks * C * cd_bytes           # broadcast fused weight
        io = 2 * tb * C * N * (in_bytes + out_bytes)   # double-buffered DMA blocks
        consts = 2 * (N * N * cd_bytes + C * Ks * C * cd_bytes + C * N * 4)
        return cheb_scratch + cheb_cd + transient + w_bcast + io + consts

    best_key, best_tb = None, 1                        # tb=1 is the safe fallback
    for tb in range(1, BT + 1):
        if BT % tb:
            continue
        if tile_bytes(tb) > budget_bytes:
            continue
        steps = BT // tb
        key = (steps % max(step_multiple, 1) == 0,     # load both TCs on v7x
               tb * C >= 256,                          # keep the MXU M dim fed
               tb)                                     # then fattest / fewest steps
        if best_key is None or key > best_key:
            best_key, best_tb = key, tb
    return best_tb


def cheb_graph_conv_layer_pallas(x_al_nchw, gso, weight, bias,
                                 compute_dtype=jnp.bfloat16):
    """Fused ChebGraphConv + bias + residual.  x_al_nchw: aligned (B, C, T, N)."""
    B, C, T, N = x_al_nchw.shape
    Ks = weight.shape[0]
    BT = B * T

    # TODO(synk): if neighbouring STGCN layers adopt the kernel's (b*t, c, n)
    # layout (or the C<->T swizzle moves into the kernel as a VMEM transpose),
    # the two transposes below can be elided entirely.
    x_btcn = jnp.transpose(x_al_nchw, (0, 2, 1, 3)).reshape(BT, C, N)

    # Grid-invariant operands: pre-transpose / fuse / cast ONCE in the wrapper.
    gso_t = gso.T.astype(compute_dtype)                          # (N, N), unpadded
    w_fusedT = weight.reshape(Ks * C, C).T.astype(compute_dtype)  # (C, Ks*C)
    bias2 = jnp.broadcast_to(bias.astype(jnp.float32)[:, None], (C, N))

    in_bytes = x_btcn.dtype.itemsize
    out_bytes = x_al_nchw.dtype.itemsize
    cd_bytes = jnp.dtype(compute_dtype).itemsize

    bt_tile = _pick_bt_tile(BT, C, N, Ks, in_bytes, out_bytes, cd_bytes,
                            step_multiple=_tensorcores_per_chip())
    grid = (BT // bt_tile,)

    out = pl.pallas_call(
        functools.partial(_cheb_gcn_kernel, Ks=Ks, BT_TILE=bt_tile, C=C, N=N,
                          cdtype=compute_dtype),
        out_shape=jax.ShapeDtypeStruct((BT, C, N), x_al_nchw.dtype),
        grid_spec=pltpu.PrefetchScalarGridSpec(
            num_scalar_prefetch=0,
            grid=grid,
            in_specs=[
                pl.BlockSpec((bt_tile, C, N), lambda i: (i, 0, 0)),
                pl.BlockSpec((N, N), lambda i: (0, 0)),
                pl.BlockSpec((C, Ks * C), lambda i: (0, 0)),
                pl.BlockSpec((C, N), lambda i: (0, 0)),
            ],
            out_specs=pl.BlockSpec((bt_tile, C, N), lambda i: (i, 0, 0)),
            scratch_shapes=[pltpu.VMEM((bt_tile, Ks * C, N), jnp.float32)],
        ),
        compiler_params=pltpu.CompilerParams(
            dimension_semantics=("parallel",),
            vmem_limit_bytes=_VMEM_LIMIT_BYTES),
    )(x_btcn, gso_t, w_fusedT, bias2)

    # (BT, C, N) -> (B, T, C, N) -> NCHW (B, C, T, N)
    return jnp.transpose(out.reshape(B, T, C, N), (0, 2, 1, 3))


def graph_conv_layer_forward(x_nchw, gso, weight, bias,
                             align_w=None, align_b=None,
                             compute_dtype=jnp.bfloat16):
    """Full GraphConvLayer forward (cheb_graph_conv). Input/output NCHW."""
    B, c_in, T, N = x_nchw.shape
    c_out = weight.shape[-1]

    # --- Align (plain-JAX glue) ---
    if c_in > c_out:
        if align_w is None or align_b is None:
            raise ValueError("align_w / align_b required when c_in > c_out")
        x_al = (jnp.einsum('oc,bctn->botn', align_w, x_nchw)
                + align_b[None, :, None, None])
    elif c_in < c_out:
        pad = jnp.zeros((B, c_out - c_in, T, N), dtype=x_nchw.dtype)
        x_al = jnp.concatenate([x_nchw, pad], axis=1)
    else:
        x_al = x_nchw

    return cheb_graph_conv_layer_pallas(x_al, gso, weight, bias,
                                        compute_dtype=compute_dtype)


def _reference(x_nchw, gso, weight, bias):
    """Pure-JAX reference replicating the PyTorch forward."""
    B, c_in, T, N = x_nchw.shape
    c_out = weight.shape[-1]
    if c_in < c_out:
        pad = jnp.zeros((B, c_out - c_in, T, N), dtype=x_nchw.dtype)
        x_al = jnp.concatenate([x_nchw, pad], axis=1)
    else:
        x_al = x_nchw
    x = jnp.transpose(x_al, (0, 2, 3, 1))  # (B, T, N, C)
    Ks = weight.shape[0]
    x_list = [x]
    if Ks >= 2:
        x_list.append(jnp.einsum('hi,btij->bthj', gso, x))
        for k in range(2, Ks):
            x_list.append(jnp.einsum('hi,btij->bthj', 2.0 * gso, x_list[k - 1])
                          - x_list[k - 2])
    xs = jnp.stack(x_list, axis=2)                        # (B, T, Ks, N, C)
    gc = jnp.einsum('btkhi,kij->bthj', xs, weight) + bias
    return jnp.transpose(gc, (0, 3, 1, 2)) + x_al         # NCHW


if __name__ == "__main__":
    # Small shapes consistent with the module: B=2, c_in=4, c_out=8, T=8, N=16
    B, c_in, c_out, T, N, Ks = 2, 4, 8, 8, 16, 3

    key = jax.random.PRNGKey(0)
    kx, kg, kw, kb = jax.random.split(key, 4)

    x = jax.random.normal(kx, (B, c_in, T, N), dtype=jnp.float32)

    # Row-normalized random graph shift operator (keeps magnitudes bounded).
    adj = jax.random.uniform(kg, (N, N), dtype=jnp.float32)
    gso = adj / jnp.sum(adj, axis=1, keepdims=True)

    # ChebGraphConv(c_out, c_out, Ks) parameters, kaiming_uniform-style bounds.
    fan_in = c_out * c_out
    w_bound = math.sqrt(1.0 / fan_in)
    weight = jax.random.uniform(kw, (Ks, c_out, c_out), dtype=jnp.float32,
                                minval=-w_bound, maxval=w_bound)
    b_bound = 1.0 / math.sqrt(fan_in)
    bias = jax.random.uniform(kb, (c_out,), dtype=jnp.float32,
                              minval=-b_bound, maxval=b_bound)

    ref = jax.block_until_ready(_reference(x, gso, weight, bias))

    # Default path: bf16 MXU operands, f32 accumulation (all TPU generations).
    fwd_bf16 = jax.jit(graph_conv_layer_forward)
    out_bf16 = jax.block_until_ready(fwd_bf16(x, gso, weight, bias))
    np.testing.assert_allclose(np.asarray(out_bf16), np.asarray(ref),
                               rtol=5e-2, atol=5e-2)

    # Exact path: f32 MXU operands.
    fwd_f32 = jax.jit(functools.partial(graph_conv_layer_forward,
                                        compute_dtype=jnp.float32))
    out_f32 = jax.block_until_ready(fwd_f32(x, gso, weight, bias))
    np.testing.assert_allclose(np.asarray(out_f32), np.asarray(ref),
                               rtol=1e-2, atol=1e-2)

    print("KERNEL_OK")
</pallas_src>

<mosaic_0001>
module attributes {stable_mosaic.version = 11 : i64} {
  func.func @_cheb_gcn_kernel(%arg0: i32, %arg1: memref<16x8x16xf32, #tpu.memory_space<vmem>>, %arg2: memref<16x16xbf16, #tpu.memory_space<vmem>>, %arg3: memref<8x24xbf16, #tpu.memory_space<vmem>>, %arg4: memref<8x16xf32, #tpu.memory_space<vmem>>, %arg5: memref<16x8x16xf32, #tpu.memory_space<vmem>>, %arg6: memref<16x24x16xf32, #tpu.memory_space<vmem>>) attributes {dimension_semantics = [#tpu.dimension_semantics<parallel>], iteration_bounds = array<i64: 1>, scalar_prefetch = 0 : i64, scratch_operands = 1 : i64, tpu.core_type = #tpu.core_type<tc>, window_params = [{transform_indices = @transform_0, window_bounds = array<i64: 16, 8, 16>}, {pipeline_mode = #tpu.pipeline_mode<synchronous>, transform_indices = @transform_1, window_bounds = array<i64: 16, 16>}, {pipeline_mode = #tpu.pipeline_mode<synchronous>, transform_indices = @transform_2, window_bounds = array<i64: 8, 24>}, {pipeline_mode = #tpu.pipeline_mode<synchronous>, transform_indices = @transform_3, window_bounds = array<i64: 8, 16>}, {transform_indices = @transform_4, window_bounds = array<i64: 16, 8, 16>}]} {
    %c0 = arith.constant 0 : index
    %c0_0 = arith.constant 0 : index
    %0 = vector.load %arg2[%c0, %c0_0] : memref<16x16xbf16, #tpu.memory_space<vmem>>, vector<16x16xbf16>
    %c0_1 = arith.constant 0 : index
    %c0_2 = arith.constant 0 : index
    %c0_3 = arith.constant 0 : index
    %1 = vector.load %arg1[%c0_1, %c0_2, %c0_3] : memref<16x8x16xf32, #tpu.memory_space<vmem>>, vector<16x8x16xf32>
    %c0_4 = arith.constant 0 : index
    %c0_5 = arith.constant 0 : index
    %c0_6 = arith.constant 0 : index
    %2 = vector.load %arg6[%c0_4, %c0_5, %c0_6] : memref<16x24x16xf32, #tpu.memory_space<vmem>>, vector<16x8x16xf32>
    tpu.vector_store %arg6[%c0_4, %c0_5, %c0_6], %1 {strides = array<i32>} : memref<16x24x16xf32, #tpu.memory_space<vmem>>, vector<16x8x16xf32>,
    %3 = vector.shape_cast %1 : vector<16x8x16xf32> to vector<128x16xf32>
    %4 = arith.truncf %3 : vector<128x16xf32> to vector<128x16xbf16>
    %cst = arith.constant dense<0.000000e+00> : vector<128x16xf32>
    %5 = tpu.matmul %4, %0, %cst {dimension_numbers = #tpu.dot_dimension_numbers<[1], [0], [0], [1], [0, 0, 1, 1], [], []>} : vector<128x16xbf16>, vector<16x16xbf16>, vector<128x16xf32> -> vector<128x16xf32>
    %6 = vector.shape_cast %5 : vector<128x16xf32> to vector<16x8x16xf32>
    %c0_7 = arith.constant 0 : index
    %c8 = arith.constant 8 : index
    %c0_8 = arith.constant 0 : index
    %7 = vector.load %arg6[%c0_7, %c8, %c0_8] : memref<16x24x16xf32, #tpu.memory_space<vmem>>, vector<16x8x16xf32>
    tpu.vector_store %arg6[%c0_7, %c8, %c0_8], %6 {strides = array<i32>} : memref<16x24x16xf32, #tpu.memory_space<vmem>>, vector<16x8x16xf32>,
    %c0_9 = arith.constant 0 : index
    %c8_10 = arith.constant 8 : index
    %c0_11 = arith.constant 0 : index
    %8 = vector.load %arg6[%c0_9, %c8_10, %c0_11] : memref<16x24x16xf32, #tpu.memory_space<vmem>>, vector<16x8x16xf32>
    %9 = vector.shape_cast %8 : vector<16x8x16xf32> to vector<128x16xf32>
    %c0_12 = arith.constant 0 : index
    %c0_13 = arith.constant 0 : index
    %c0_14 = arith.constant 0 : index
    %10 = vector.load %arg6[%c0_12, %c0_13, %c0_14] : memref<16x24x16xf32, #tpu.memory_space<vmem>>, vector<16x8x16xf32>
    %11 = arith.truncf %9 : vector<128x16xf32> to vector<128x16xbf16>
    %cst_15 = arith.constant dense<0.000000e+00> : vector<128x16xf32>
    %12 = tpu.matmul %11, %0, %cst_15 {dimension_numbers = #tpu.dot_dimension_numbers<[1], [0], [0], [1], [0, 0, 1, 1], [], []>} : vector<128x16xbf16>, vector<16x16xbf16>, vector<128x16xf32> -> vector<128x16xf32>
    %13 = vector.shape_cast %12 : vector<128x16xf32> to vector<16x8x16xf32>
    %cst_16 = arith.constant 2.000000e+00 : f32
    %14 = vector.broadcast %cst_16 : f32 to vector<16x8x16xf32>
    %15 = arith.mulf %14, %13 : vector<16x8x16xf32>
    %16 = arith.subf %15, %10 : vector<16x8x16xf32>
    %c0_17 = arith.constant 0 : index
    %c16 = arith.constant 16 : index
    %c0_18 = arith.constant 0 : index
    %17 = vector.load %arg6[%c0_17, %c16, %c0_18] : memref<16x24x16xf32, #tpu.memory_space<vmem>>, vector<16x8x16xf32>
    tpu.vector_store %arg6[%c0_17, %c16, %c0_18], %16 {strides = array<i32>} : memref<16x24x16xf32, #tpu.memory_space<vmem>>, vector<16x8x16xf32>,
    %c0_19 = arith.constant 0 : index
    %c0_20 = arith.constant 0 : index
    %18 = vector.load %arg3[%c0_19, %c0_20] : memref<8x24xbf16, #tpu.memory_space<vmem>>, vector<8x24xbf16>
    %19 = vector.shape_cast %18 : vector<8x24xbf16> to vector<1x8x24xbf16>
    %20 = vector.shape_cast %19 : vector<1x8x24xbf16> to vector<1x8x24xbf16>
    %21 = vector.broadcast %20 : vector<1x8x24xbf16> to vector<16x8x24xbf16>
    %c0_21 = arith.constant 0 : index
    %c0_22 = arith.constant 0 : index
    %c0_23 = arith.constant 0 : index
    %22 = vector.load %arg6[%c0_21, %c0_22, %c0_23] : memref<16x24x16xf32, #tpu.memory_space<vmem>>, vector<16x24x16xf32>
    %23 = arith.truncf %22 : vector<16x24x16xf32> to vector<16x24x16xbf16>
    %cst_24 = arith.constant dense<0.000000e+00> : vector<16x8x16xf32>
    %24 = tpu.matmul %21, %23, %cst_24 {dimension_numbers = #tpu.dot_dimension_numbers<[2], [1], [1], [2], [0, 0, 0, 1, 1, 2], [0], [0]>} : vector<16x8x24xbf16>, vector<16x24x16xbf16>, vector<16x8x16xf32> -> vector<16x8x16xf32>
    %c0_25 = arith.constant 0 : index
    %c0_26 = arith.constant 0 : index
    %25 = vector.load %arg4[%c0_25, %c0_26] : memref<8x16xf32, #tpu.memory_space<vmem>>, vector<8x16xf32>
    %26 = vector.shape_cast %25 : vector<8x16xf32> to vector<1x8x16xf32>
    %27 = vector.broadcast %26 : vector<1x8x16xf32> to vector<16x8x16xf32>
    %28 = arith.addf %24, %27 : vector<16x8x16xf32>
    %29 = arith.addf %28, %1 : vector<16x8x16xf32>
    %c0_27 = arith.constant 0 : index
    %c0_28 = arith.constant 0 : index
    %c0_29 = arith.constant 0 : index
    %30 = vector.load %arg5[%c0_27, %c0_28, %c0_29] : memref<16x8x16xf32, #tpu.memory_space<vmem>>, vector<16x8x16xf32>
    tpu.vector_store %arg5[%c0_27, %c0_28, %c0_29], %29 {strides = array<i32>} : memref<16x8x16xf32, #tpu.memory_space<vmem>>, vector<16x8x16xf32>,
    return
  }
  func.func @transform_0(%arg0: i32) -> (i32, i32, i32) {
    %c0_i32 = arith.constant 0 : i32
    %c0_i32_0 = arith.constant 0 : i32
    %c0_i32_1 = arith.constant 0 : i32
    return %arg0, %c0_i32, %c0_i32_0 : i32, i32, i32
  }
  func.func @transform_1(%arg0: i32) -> (i32, i32) {
    %c0_i32 = arith.constant 0 : i32
    %c0_i32_0 = arith.constant 0 : i32
    %c0_i32_1 = arith.constant 0 : i32
    return %c0_i32, %c0_i32_0 : i32, i32
  }
  func.func @transform_2(%arg0: i32) -> (i32, i32) {
    %c0_i32 = arith.constant 0 : i32
    %c0_i32_0 = arith.constant 0 : i32
    %c0_i32_1 = arith.constant 0 : i32
    return %c0_i32, %c0_i32_0 : i32, i32
  }
  func.func @transform_3(%arg0: i32) -> (i32, i32) {
    %c0_i32 = arith.constant 0 : i32
    %c0_i32_0 = arith.constant 0 : i32
    %c0_i32_1 = arith.constant 0 : i32
    return %c0_i32, %c0_i32_0 : i32, i32
  }
  func.func @transform_4(%arg0: i32) -> (i32, i32, i32) {
    %c0_i32 = arith.constant 0 : i32
    %c0_i32_0 = arith.constant 0 : i32
    %c0_i32_1 = arith.constant 0 : i32
    return %arg0, %c0_i32, %c0_i32_0 : i32, i32, i32
  }
}

</mosaic_0001>

<llo_original>
// kernel: graph_conv_layer_forward.1
$region0: #{graph_conv_layer_forward.1}
  #allocation0 [shape = 'u32[]', space=smem, size = 0x4, offset = 0x4, fixed_abs, tag = 'smem constant byte address 0x4 - core index']
  #allocation1 [shape = 'u32[144,128]{1,0:T(1,128)}', space=vmem, size = 0x12000, scoped, tag = 'internal scratch']
  #allocation2 [shape = 'f32[16,24,16]{2,1,0:T(8,128)}', space=vmem, size = 0x30000, scoped, tag = 'scratch operand']
  %s0 = inlined_call_operand.vmem [shape: f32[16,8,16], index: 0, kind: input, shape index: {}]
  %s1 = inlined_call_operand.vmem [shape: bf16[16,16], index: 1, kind: input, shape index: {}]
  %s2 = inlined_call_operand.vmem [shape: bf16[8,24], index: 2, kind: input, shape index: {}]
  %s3 = inlined_call_operand.vmem [shape: f32[8,16], index: 3, kind: input, shape index: {}]
  %s4 = inlined_call_operand.vmem [shape: f32[16,8,16], index: 4, kind: output, shape index: {}]
  %s5 = sld [smem:[#allocation0]]
  $region26: #{graph_conv_layer_forward.1} parent=0
    _
  %s7 = ssub.s32 1, %s5
  %s8 = scalar_select 0, %s7, %s5
  // Predicated region
  $region2: #{graph_conv_layer_forward.1} parent=0 // pred_check
    _
  $region3: #{graph_conv_layer_forward.1} parent=0 // pred_check_branch
    %10 = sbr.rel (0) target = $region5
  $region4: #{graph_conv_layer_forward.1} parent=0 // pred_region
    _
  $region5: #{graph_conv_layer_forward.1} parent=0 // pred_fallthru
    _
  // Predicated region
  $region6: #{graph_conv_layer_forward.1} parent=0 // pred_check
    _
  $region7: #{graph_conv_layer_forward.1} parent=0 // pred_check_branch
    %12 = sbr.rel (0) target = $region9
  $region8: #{graph_conv_layer_forward.1} parent=0 // pred_region
    _
  $region9: #{graph_conv_layer_forward.1} parent=0 // pred_fallthru
    _
  // Predicated region
  $region10: #{graph_conv_layer_forward.1} parent=0 // pred_check
    _
  $region11: #{graph_conv_layer_forward.1} parent=0 // pred_check_branch
    %14 = sbr.rel (0) target = $region13
  $region12: #{graph_conv_layer_forward.1} parent=0 // pred_region
    _
  $region13: #{graph_conv_layer_forward.1} parent=0 // pred_fallthru
    _
  // Predicated region
  $region14: #{graph_conv_layer_forward.1} parent=0 // pred_check
    _
  $region15: #{graph_conv_layer_forward.1} parent=0 // pred_check_branch
    %16 = sbr.rel (0) target = $region17
  $region16: #{graph_conv_layer_forward.1} parent=0 // pred_region
    _
  $region17: #{graph_conv_layer_forward.1} parent=0 // pred_fallthru
    _
  %v18 = vld [vmem:[%s1] sm:$0xf]
  %v19 = vld [vmem:[%s1 + $0x4] sm:$0xf]
  %v20 = vld [vmem:[%s0] sm:$0xff]
  %v21 = vld [vmem:[%s0 + $0x8] sm:$0xff]
  %v22 = vld [vmem:[%s0 + $0x10] sm:$0xff]
  %v23 = vld [vmem:[%s0 + $0x18] sm:$0xff]
  %v24 = vld [vmem:[%s0 + $0x20] sm:$0xff]
  %v25 = vld [vmem:[%s0 + $0x28] sm:$0xff]
  %v26 = vld [vmem:[%s0 + $0x30] sm:$0xff]
  %v27 = vld [vmem:[%s0 + $0x38] sm:$0xff]
  %v28 = vld [vmem:[%s0 + $0x40] sm:$0xff]
  %v29 = vld [vmem:[%s0 + $0x48] sm:$0xff]
  %v30 = vld [vmem:[%s0 + $0x50] sm:$0xff]
  %v31 = vld [vmem:[%s0 + $0x58] sm:$0xff]
  %v32 = vld [vmem:[%s0 + $0x60] sm:$0xff]
  %v33 = vld [vmem:[%s0 + $0x68] sm:$0xff]
  %v34 = vld [vmem:[%s0 + $0x70] sm:$0xff]
  %v35 = vld [vmem:[%s0 + $0x78] sm:$0xff]
  %vm36 = vcmask 130048
  %37 = vst.msk [vmem:[#allocation2] sm:$0xff] %vm36, %v20
  %38 = vst.msk [vmem:[#allocation2 + $0x18] sm:$0xff] %vm36, %v21
  %39 = vst.msk [vmem:[#allocation2 + $0x30] sm:$0xff] %vm36, %v22
  %40 = vst.msk [vmem:[#allocation2 + $0x48] sm:$0xff] %vm36, %v23
  %41 = vst.msk [vmem:[#allocation2 + $0x60] sm:$0xff] %vm36, %v24
  %42 = vst.msk [vmem:[#allocation2 + $0x78] sm:$0xff] %vm36, %v25
  %43 = vst.msk [vmem:[#allocation2 + $0x90] sm:$0xff] %vm36, %v26
  %44 = vst.msk [vmem:[#allocation2 + $0xa8] sm:$0xff] %vm36, %v27
  %45 = vst.msk [vmem:[#allocation2 + $0xc0] sm:$0xff] %vm36, %v28
  %46 = vst.msk [vmem:[#allocation2 + $0xd8] sm:$0xff] %vm36, %v29
  %47 = vst.msk [vmem:[#allocation2 + $0xf0] sm:$0xff] %vm36, %v30
  %48 = vst.msk [vmem:[#allocation2 + $0x108] sm:$0xff] %vm36, %v31
  %49 = vst.msk [vmem:[#allocation2 + $0x120] sm:$0xff] %vm36, %v32
  %50 = vst.msk [vmem:[#allocation2 + $0x138] sm:$0xff] %vm36, %v33
  %51 = vst.msk [vmem:[#allocation2 + $0x150] sm:$0xff] %vm36, %v34
  %52 = vst.msk [vmem:[#allocation2 + $0x168] sm:$0xff] %vm36, %v35
  %v53 = vpack.c.bf16 %v21, %v20
  %v54 = vpack.c.bf16 %v23, %v22
  %v55 = vpack.c.bf16 %v25, %v24
  %v56 = vpack.c.bf16 %v27, %v26
  %v57 = vpack.c.bf16 %v29, %v28
  %v58 = vpack.c.bf16 %v31, %v30
  %v59 = vpack.c.bf16 %v33, %v32
  %v60 = vpack.c.bf16 %v35, %v34
  %v63 = vunpack.c.l.b16 %v18
  %v64 = vunpack.c.l.b16 %v19
  %v65 = vpack.c.b16 %v64, %v63
  %v68 = vsel %vm36, %v53, 0
  %v71 = vsel %vm36, %v54, 0
  %v74 = vsel %vm36, %v55, 0
  %v77 = vsel %vm36, %v56, 0
  %v80 = vsel %vm36, %v57, 0
  %v83 = vsel %vm36, %v58, 0
  %v86 = vsel %vm36, %v59, 0
  %v89 = vsel %vm36, %v60, 0
  %91 = vmatprep.subr.bf16.mxu0 0
  %92 = vmatpush1.bf16.msra.mxu0 0
  %93 = vmatprep.subr.bf16.mxu0 0
  %94 = vmatpush1.bf16.msra.mxu0 0
  %95 = vmatprep.subr.bf16.mxu0 0
  %96 = vmatpush1.bf16.msra.mxu0 0
  %97 = vmatprep.subr.bf16.mxu0 0
  %98 = vmatpush1.bf16.msra.mxu0 0
  %99 = vmatprep.subr.bf16.mxu0 0
  %100 = vmatpush1.bf16.msra.mxu0 0
  %101 = vmatprep.subr.bf16.mxu0 0
  %102 = vmatpush1.bf16.msra.mxu0 0
  %103 = vmatprep.subr.bf16.mxu0 0
  %104 = vmatpush1.bf16.msra.mxu0 0
  %105 = vmatprep.subr.bf16.mxu0 0
  %106 = vmatpush1.bf16.msra.mxu0 %v65
  %107 = vmatprep.subr.bf16.mxu0 0
  %108 = vmatpush2.bf16.msra.mxu0 0
  %109 = vmatprep.subr.bf16.mxu0 0
  %110 = vmatpush2.bf16.msra.mxu0 0
  %111 = vmatprep.subr.bf16.mxu0 0
  %112 = vmatpush2.bf16.msra.mxu0 0
  %113 = vmatprep.subr.bf16.mxu0 0
  %114 = vmatpush2.bf16.msra.mxu0 0
  %115 = vmatprep.subr.bf16.mxu0 0
  %116 = vmatpush2.bf16.msra.mxu0 0
  %117 = vmatprep.subr.bf16.mxu0 0
  %118 = vmatpush2.bf16.msra.mxu0 0
  %119 = vmatprep.subr.bf16.mxu0 0
  %120 = vmatpush2.bf16.msra.mxu0 0
  %121 = vmatprep.subr.bf16.mxu0 0
  %122 = vmatpush2.bf16.msra.mxu0 0
  %123 = vmatprep.mubr.bf16.mxu0 0
  %124 = vmatmul.mubr.bf16.gmra.mxu0 %v68
  %v125 = vpop.f32.mrf.mxu0
  %v126 = vadd.f32 0.0, %v125
  %v127 = vpop.f32.mrf.mxu0
  %v128 = vpop.f32.mrf.mxu0
  %v129 = vadd.f32 0.0, %v128
  %v130 = vpop.f32.mrf.mxu0
  %131 = vmatprep.mubr.bf16.mxu0 0
  %132 = vmatmul.mubr.bf16.gmra.mxu0 %v71
  %v133 = vpop.f32.mrf.mxu0
  %v134 = vadd.f32 0.0, %v133
  %v135 = vpop.f32.mrf.mxu0
  %v136 = vpop.f32.mrf.mxu0
  %v137 = vadd.f32 0.0, %v136
  %v138 = vpop.f32.mrf.mxu0
  %139 = vmatprep.mubr.bf16.mxu0 0
  %140 = vmatmul.mubr.bf16.gmra.mxu0 %v74
  %v141 = vpop.f32.mrf.mxu0
  %v142 = vadd.f32 0.0, %v141
  %v143 = vpop.f32.mrf.mxu0
  %v144 = vpop.f32.mrf.mxu0
  %v145 = vadd.f32 0.0, %v144
  %v146 = vpop.f32.mrf.mxu0
  %147 = vmatprep.mubr.bf16.mxu0 0
  %148 = vmatmul.mubr.bf16.gmra.mxu0 %v77
  %v149 = vpop.f32.mrf.mxu0
  %v150 = vadd.f32 0.0, %v149
  %v151 = vpop.f32.mrf.mxu0
  %v152 = vpop.f32.mrf.mxu0
  %v153 = vadd.f32 0.0, %v152
  %v154 = vpop.f32.mrf.mxu0
  %155 = vmatprep.mubr.bf16.mxu0 0
  %156 = vmatmul.mubr.bf16.gmra.mxu0 %v80
  %v157 = vpop.f32.mrf.mxu0
  %v158 = vadd.f32 0.0, %v157
  %v159 = vpop.f32.mrf.mxu0
  %v160 = vpop.f32.mrf.mxu0
  %v161 = vadd.f32 0.0, %v160
  %v162 = vpop.f32.mrf.mxu0
  %163 = vmatprep.mubr.bf16.mxu0 0
  %164 = vmatmul.mubr.bf16.gmra.mxu0 %v83
  %v165 = vpop.f32.mrf.mxu0
  %v166 = vadd.f32 0.0, %v165
  %v167 = vpop.f32.mrf.mxu0
  %v168 = vpop.f32.mrf.mxu0
  %v169 = vadd.f32 0.0, %v168
  %v170 = vpop.f32.mrf.mxu0
  %171 = vmatprep.mubr.bf16.mxu0 0
  %172 = vmatmul.mubr.bf16.gmra.mxu0 %v86
  %v173 = vpop.f32.mrf.mxu0
  %v174 = vadd.f32 0.0, %v173
  %v175 = vpop.f32.mrf.mxu0
  %v176 = vpop.f32.mrf.mxu0
  %v177 = vadd.f32 0.0, %v176
  %v178 = vpop.f32.mrf.mxu0
  %179 = vmatprep.mubr.bf16.mxu0 0
  %180 = vmatmul.mubr.bf16.gmra.mxu0 %v89
  %v181 = vpop.f32.mrf.mxu0
  %v182 = vadd.f32 0.0, %v181
  %v183 = vpop.f32.mrf.mxu0
  %v184 = vpop.f32.mrf.mxu0
  %v185 = vadd.f32 0.0, %v184
  %v186 = vpop.f32.mrf.mxu0
  %187 = vdwg.mxu0
  %188 = vst.msk [vmem:[#allocation2 + $0x8] sm:$0xff] %vm36, %v126
  %189 = vst.msk [vmem:[#allocation2 + $0x20] sm:$0xff] %vm36, %v129
  %190 = vst.msk [vmem:[#allocation2 + $0x38] sm:$0xff] %vm36, %v134
  %191 = vst.msk [vmem:[#allocation2 + $0x50] sm:$0xff] %vm36, %v137
  %192 = vst.msk [vmem:[#allocation2 + $0x68] sm:$0xff] %vm36, %v142
  %193 = vst.msk [vmem:[#allocation2 + $0x80] sm:$0xff] %vm36, %v145
  %194 = vst.msk [vmem:[#allocation2 + $0x98] sm:$0xff] %vm36, %v150
  %195 = vst.msk [vmem:[#allocation2 + $0xb0] sm:$0xff] %vm36, %v153
  %196 = vst.msk [vmem:[#allocation2 + $0xc8] sm:$0xff] %vm36, %v158
  %197 = vst.msk [vmem:[#allocation2 + $0xe0] sm:$0xff] %vm36, %v161
  %198 = vst.msk [vmem:[#allocation2 + $0xf8] sm:$0xff] %vm36, %v166
  %199 = vst.msk [vmem:[#allocation2 + $0x110] sm:$0xff] %vm36, %v169
  %200 = vst.msk [vmem:[#allocation2 + $0x128] sm:$0xff] %vm36, %v174
  %201 = vst.msk [vmem:[#allocation2 + $0x140] sm:$0xff] %vm36, %v177
  %202 = vst.msk [vmem:[#allocation2 + $0x158] sm:$0xff] %vm36, %v182
  %203 = vst.msk [vmem:[#allocation2 + $0x170] sm:$0xff] %vm36, %v185
  %v204 = vld [vmem:[#allocation2 + $0x8] sm:$0xff]
  %v205 = vld [vmem:[#allocation2 + $0x20] sm:$0xff]
  %v206 = vld [vmem:[#allocation2 + $0x38] sm:$0xff]
  %v207 = vld [vmem:[#allocation2 + $0x50] sm:$0xff]
  %v208 = vld [vmem:[#allocation2 + $0x68] sm:$0xff]
  %v209 = vld [vmem:[#allocation2 + $0x80] sm:$0xff]
  %v210 = vld [vmem:[#allocation2 + $0x98] sm:$0xff]
  %v211 = vld [vmem:[#allocation2 + $0xb0] sm:$0xff]
  %v212 = vld [vmem:[#allocation2 + $0xc8] sm:$0xff]
  %v213 = vld [vmem:[#allocation2 + $0xe0] sm:$0xff]
  %v214 = vld [vmem:[#allocation2 + $0xf8] sm:$0xff]
  %v215 = vld [vmem:[#allocation2 + $0x110] sm:$0xff]
  %v216 = vld [vmem:[#allocation2 + $0x128] sm:$0xff]
  %v217 = vld [vmem:[#allocation2 + $0x140] sm:$0xff]
  %v218 = vld [vmem:[#allocation2 + $0x158] sm:$0xff]
  %v219 = vld [vmem:[#allocation2 + $0x170] sm:$0xff]
  %v220 = vld [vmem:[#allocation2] sm:$0xff]
  %v221 = vld [vmem:[#allocation2 + $0x18] sm:$0xff]
  %v222 = vld [vmem:[#allocation2 + $0x30] sm:$0xff]
  %v223 = vld [vmem:[#allocation2 + $0x48] sm:$0xff]
  %v224 = vld [vmem:[#allocation2 + $0x60] sm:$0xff]
  %v225 = vld [vmem:[#allocation2 + $0x78] sm:$0xff]
  %v226 = vld [vmem:[#allocation2 + $0x90] sm:$0xff]
  %v227 = vld [vmem:[#allocation2 + $0xa8] sm:$0xff]
  %v228 = vld [vmem:[#allocation2 + $0xc0] sm:$0xff]
  %v229 = vld [vmem:[#allocation2 + $0xd8] sm:$0xff]
  %v230 = vld [vmem:[#allocation2 + $0xf0] sm:$0xff]
  %v231 = vld [vmem:[#allocation2 + $0x108] sm:$0xff]
  %v232 = vld [vmem:[#allocation2 + $0x120] sm:$0xff]
  %v233 = vld [vmem:[#allocation2 + $0x138] sm:$0xff]
  %v234 = vld [vmem:[#allocation2 + $0x150] sm:$0xff]
  %v235 = vld [vmem:[#allocation2 + $0x168] sm:$0xff]
  %v236 = vpack.c.bf16 %v205, %v204
  %v237 = vpack.c.bf16 %v207, %v206
  %v238 = vpack.c.bf16 %v209, %v208
  %v239 = vpack.c.bf16 %v211, %v210
  %v240 = vpack.c.bf16 %v213, %v212
  %v241 = vpack.c.bf16 %v215, %v214
  %v242 = vpack.c.bf16 %v217, %v216
  %v243 = vpack.c.bf16 %v219, %v218
  %v245 = vsel %vm36, %v236, 0
  %v248 = vsel %vm36, %v237, 0
  %v251 = vsel %vm36, %v238, 0
  %v254 = vsel %vm36, %v239, 0
  %v257 = vsel %vm36, %v240, 0
  %v260 = vsel %vm36, %v241, 0
  %v263 = vsel %vm36, %v242, 0
  %v266 = vsel %vm36, %v243, 0
  %268 = vmatprep.subr.bf16.mxu0 0
  %269 = vmatpush1.bf16.msra.mxu0 0
  %270 = vmatprep.subr.bf16.mxu0 0
  %271 = vmatpush1.bf16.msra.mxu0 0
  %272 = vmatprep.subr.bf16.mxu0 0
  %273 = vmatpush1.bf16.msra.mxu0 0
  %274 = vmatprep.subr.bf16.mxu0 0
  %275 = vmatpush1.bf16.msra.mxu0 0
  %276 = vmatprep.subr.bf16.mxu0 0
  %277 = vmatpush1.bf16.msra.mxu0 0
  %278 = vmatprep.subr.bf16.mxu0 0
  %279 = vmatpush1.bf16.msra.mxu0 0
  %280 = vmatprep.subr.bf16.mxu0 0
  %281 = vmatpush1.bf16.msra.mxu0 0
  %282 = vmatprep.subr.bf16.mxu0 0
  %283 = vmatpush1.bf16.msra.mxu0 %v65
  %284 = vmatprep.subr.bf16.mxu0 0
  %285 = vmatpush2.bf16.msra.mxu0 0
  %286 = vmatprep.subr.bf16.mxu0 0
  %287 = vmatpush2.bf16.msra.mxu0 0
  %288 = vmatprep.subr.bf16.mxu0 0
  %289 = vmatpush2.bf16.msra.mxu0 0
  %290 = vmatprep.subr.bf16.mxu0 0
  %291 = vmatpush2.bf16.msra.mxu0 0
  %292 = vmatprep.subr.bf16.mxu0 0
  %293 = vmatpush2.bf16.msra.mxu0 0
  %294 = vmatprep.subr.bf16.mxu0 0
  %295 = vmatpush2.bf16.msra.mxu0 0
  %296 = vmatprep.subr.bf16.mxu0 0
  %297 = vmatpush2.bf16.msra.mxu0 0
  %298 = vmatprep.subr.bf16.mxu0 0
  %299 = vmatpush2.bf16.msra.mxu0 0
  %300 = vmatprep.mubr.bf16.mxu0 0
  %301 = vmatmul.mubr.bf16.gmra.mxu0 %v245
  %v302 = vpop.f32.mrf.mxu0
  %v303 = vadd.f32 0.0, %v302
  %v304 = vpop.f32.mrf.mxu0
  %v305 = vpop.f32.mrf.mxu0
  %v306 = vadd.f32 0.0, %v305
  %v307 = vpop.f32.mrf.mxu0
  %308 = vmatprep.mubr.bf16.mxu0 0
  %309 = vmatmul.mubr.bf16.gmra.mxu0 %v248
  %v310 = vpop.f32.mrf.mxu0
  %v311 = vadd.f32 0.0, %v310
  %v312 = vpop.f32.mrf.mxu0
  %v313 = vpop.f32.mrf.mxu0
  %v314 = vadd.f32 0.0, %v313
  %v315 = vpop.f32.mrf.mxu0
  %316 = vmatprep.mubr.bf16.mxu0 0
  %317 = vmatmul.mubr.bf16.gmra.mxu0 %v251
  %v318 = vpop.f32.mrf.mxu0
  %v319 = vadd.f32 0.0, %v318
  %v320 = vpop.f32.mrf.mxu0
  %v321 = vpop.f32.mrf.mxu0
  %v322 = vadd.f32 0.0, %v321
  %v323 = vpop.f32.mrf.mxu0
  %324 = vmatprep.mubr.bf16.mxu0 0
  %325 = vmatmul.mubr.bf16.gmra.mxu0 %v254
  %v326 = vpop.f32.mrf.mxu0
  %v327 = vadd.f32 0.0, %v326
  %v328 = vpop.f32.mrf.mxu0
  %v329 = vpop.f32.mrf.mxu0
  %v330 = vadd.f32 0.0, %v329
  %v331 = vpop.f32.mrf.mxu0
  %332 = vmatprep.mubr.bf16.mxu0 0
  %333 = vmatmul.mubr.bf16.gmra.mxu0 %v257
  %v334 = vpop.f32.mrf.mxu0
  %v335 = vadd.f32 0.0, %v334
  %v336 = vpop.f32.mrf.mxu0
  %v337 = vpop.f32.mrf.mxu0
  %v338 = vadd.f32 0.0, %v337
  %v339 = vpop.f32.mrf.mxu0
  %340 = vmatprep.mubr.bf16.mxu0 0
  %341 = vmatmul.mubr.bf16.gmra.mxu0 %v260
  %v342 = vpop.f32.mrf.mxu0
  %v343 = vadd.f32 0.0, %v342
  %v344 = vpop.f32.mrf.mxu0
  %v345 = vpop.f32.mrf.mxu0
  %v346 = vadd.f32 0.0, %v345
  %v347 = vpop.f32.mrf.mxu0
  %348 = vmatprep.mubr.bf16.mxu0 0
  %349 = vmatmul.mubr.bf16.gmra.mxu0 %v263
  %v350 = vpop.f32.mrf.mxu0
  %v351 = vadd.f32 0.0, %v350
  %v352 = vpop.f32.mrf.mxu0
  %v353 = vpop.f32.mrf.mxu0
  %v354 = vadd.f32 0.0, %v353
  %v355 = vpop.f32.mrf.mxu0
  %356 = vmatprep.mubr.bf16.mxu0 0
  %357 = vmatmul.mubr.bf16.gmra.mxu0 %v266
  %v358 = vpop.f32.mrf.mxu0
  %v359 = vadd.f32 0.0, %v358
  %v360 = vpop.f32.mrf.mxu0
  %v361 = vpop.f32.mrf.mxu0
  %v362 = vadd.f32 0.0, %v361
  %v363 = vpop.f32.mrf.mxu0
  %364 = vdwg.mxu0
  %v365 = vmul.f32 %v303, 2.0
  %v366 = vmul.f32 %v306, 2.0
  %v367 = vmul.f32 %v311, 2.0
  %v368 = vmul.f32 %v314, 2.0
  %v369 = vmul.f32 %v319, 2.0
  %v370 = vmul.f32 %v322, 2.0
  %v371 = vmul.f32 %v327, 2.0
  %v372 = vmul.f32 %v330, 2.0
  %v373 = vmul.f32 %v335, 2.0
  %v374 = vmul.f32 %v338, 2.0
  %v375 = vmul.f32 %v343, 2.0
  %v376 = vmul.f32 %v346, 2.0
  %v377 = vmul.f32 %v351, 2.0
  %v378 = vmul.f32 %v354, 2.0
  %v379 = vmul.f32 %v359, 2.0
  %v380 = vmul.f32 %v362, 2.0
  %v381 = vsub.f32 %v365, %v220
  %v382 = vsub.f32 %v366, %v221
  %v383 = vsub.f32 %v367, %v222
  %v384 = vsub.f32 %v368, %v223
  %v385 = vsub.f32 %v369, %v224
  %v386 = vsub.f32 %v370, %v225
  %v387 = vsub.f32 %v371, %v226
  %v388 = vsub.f32 %v372, %v227
  %v389 = vsub.f32 %v373, %v228
  %v390 = vsub.f32 %v374, %v229
  %v391 = vsub.f32 %v375, %v230
  %v392 = vsub.f32 %v376, %v231
  %v393 = vsub.f32 %v377, %v232
  %v394 = vsub.f32 %v378, %v233
  %v395 = vsub.f32 %v379, %v234
  %v396 = vsub.f32 %v380, %v235
  %397 = vst.msk [vmem:[#allocation2 + $0x10] sm:$0xff] %vm36, %v381
  %398 = vst.msk [vmem:[#allocation2 + $0x28] sm:$0xff] %vm36, %v382
  %399 = vst.msk [vmem:[#allocation2 + $0x40] sm:$0xff] %vm36, %v383
  %400 = vst.msk [vmem:[#allocation2 + $0x58] sm:$0xff] %vm36, %v384
  %401 = vst.msk [vmem:[#allocation2 + $0x70] sm:$0xff] %vm36, %v385
  %402 = vst.msk [vmem:[#allocation2 + $0x88] sm:$0xff] %vm36, %v386
  %403 = vst.msk [vmem:[#allocation2 + $0xa0] sm:$0xff] %vm36, %v387
  %404 = vst.msk [vmem:[#allocation2 + $0xb8] sm:$0xff] %vm36, %v388
  %405 = vst.msk [vmem:[#allocation2 + $0xd0] sm:$0xff] %vm36, %v389
  %406 = vst.msk [vmem:[#allocation2 + $0xe8] sm:$0xff] %vm36, %v390
  %407 = vst.msk [vmem:[#allocation2 + $0x100] sm:$0xff] %vm36, %v391
  %408 = vst.msk [vmem:[#allocation2 + $0x118] sm:$0xff] %vm36, %v392
  %409 = vst.msk [vmem:[#allocation2 + $0x130] sm:$0xff] %vm36, %v393
  %410 = vst.msk [vmem:[#allocation2 + $0x148] sm:$0xff] %vm36, %v394
  %411 = vst.msk [vmem:[#allocation2 + $0x160] sm:$0xff] %vm36, %v395
  %412 = vst.msk [vmem:[#allocation2 + $0x178] sm:$0xff] %vm36, %v396
  %v413 = vld [vmem:[%s2] sm:$0xf]
  %v414 = vld [vmem:[#allocation2] sm:$0xff]
  %v415 = vld [vmem:[#allocation2 + $0x8] sm:$0xff]
  %v416 = vld [vmem:[#allocation2 + $0x10] sm:$0xff]
  %v417 = vld [vmem:[#allocation2 + $0x18] sm:$0xff]
  %v418 = vld [vmem:[#allocation2 + $0x20] sm:$0xff]
  %v419 = vld [vmem:[#allocation2 + $0x28] sm:$0xff]
  %v420 = vld [vmem:[#allocation2 + $0x30] sm:$0xff]
  %v421 = vld [vmem:[#allocation2 + $0x38] sm:$0xff]
  %v422 = vld [vmem:[#allocation2 + $0x40] sm:$0xff]
  %v423 = vld [vmem:[#allocation2 + $0x48] sm:$0xff]
  %v424 = vld [vmem:[#allocation2 + $0x50] sm:$0xff]
  %v425 = vld [vmem:[#allocation2 + $0x58] sm:$0xff]
  %v426 = vld [vmem:[#allocation2 + $0x60] sm:$0xff]
  %v427 = vld [vmem:[#allocation2 + $0x68] sm:$0xff]
  %v428 = vld [vmem:[#allocation2 + $0x70] sm:$0xff]
  %v429 = vld [vmem:[#allocation2 + $0x78] sm:$0xff]
  %v430 = vld [vmem:[#allocation2 + $0x80] sm:$0xff]
  %v431 = vld [vmem:[#allocation2 + $0x88] sm:$0xff]
  %v432 = vld [vmem:[#allocation2 + $0x90] sm:$0xff]
  %v433 = vld [vmem:[#allocation2 + $0x98] sm:$0xff]
  %v434 = vld [vmem:[#allocation2 + $0xa0] sm:$0xff]
  %v435 = vld [vmem:[#allocation2 + $0xa8] sm:$0xff]
  %v436 = vld [vmem:[#allocation2 + $0xb0] sm:$0xff]
  %v437 = vld [vmem:[#allocation2 + $0xb8] sm:$0xff]
  %v438 = vld [vmem:[#allocation2 + $0xc0] sm:$0xff]
  %v439 = vld [vmem:[#allocation2 + $0xc8] sm:$0xff]
  %v440 = vld [vmem:[#allocation2 + $0xd0] sm:$0xff]
  %v441 = vld [vmem:[#allocation2 + $0xd8] sm:$0xff]
  %v442 = vld [vmem:[#allocation2 + $0xe0] sm:$0xff]
  %v443 = vld [vmem:[#allocation2 + $0xe8] sm:$0xff]
  %v444 = vld [vmem:[#allocation2 + $0xf0] sm:$0xff]
  %v445 = vld [vmem:[#allocation2 + $0xf8] sm:$0xff]
  %v446 = vld [vmem:[#allocation2 + $0x100] sm:$0xff]
  %v447 = vld [vmem:[#allocation2 + $0x108] sm:$0xff]
  %v448 = vld [vmem:[#allocation2 + $0x110] sm:$0xff]
  %v449 = vld [vmem:[#allocation2 + $0x118] sm:$0xff]
  %v450 = vld [vmem:[#allocation2 + $0x120] sm:$0xff]
  %v451 = vld [vmem:[#allocation2 + $0x128] sm:$0xff]
  %v452 = vld [vmem:[#allocation2 + $0x130] sm:$0xff]
  %v453 = vld [vmem:[#allocation2 + $0x138] sm:$0xff]
  %v454 = vld [vmem:[#allocation2 + $0x140] sm:$0xff]
  %v455 = vld [vmem:[#allocation2 + $0x148] sm:$0xff]
  %v456 = vld [vmem:[#allocation2 + $0x150] sm:$0xff]
  %v457 = vld [vmem:[#allocation2 + $0x158] sm:$0xff]
  %v458 = vld [vmem:[#allocation2 + $0x160] sm:$0xff]
  %v459 = vld [vmem:[#allocation2 + $0x168] sm:$0xff]
  %v460 = vld [vmem:[#allocation2 + $0x170] sm:$0xff]
  %v461 = vld [vmem:[#allocation2 + $0x178] sm:$0xff]
  %v462 = vpack.c.bf16 %v415, %v414
  %v463 = vpack.c.bf16 %v416, %v416
  %v464 = vpack.c.bf16 %v418, %v417
  %v465 = vpack.c.bf16 %v419, %v419
  %v466 = vpack.c.bf16 %v421, %v420
  %v467 = vpack.c.bf16 %v422, %v422
  %v468 = vpack.c.bf16 %v424, %v423
  %v469 = vpack.c.bf16 %v425, %v425
  %v470 = vpack.c.bf16 %v427, %v426
  %v471 = vpack.c.bf16 %v428, %v428
  %v472 = vpack.c.bf16 %v430, %v429
  %v473 = vpack.c.bf16 %v431, %v431
  %v474 = vpack.c.bf16 %v433, %v432
  %v475 = vpack.c.bf16 %v434, %v434
  %v476 = vpack.c.bf16 %v436, %v435
  %v477 = vpack.c.bf16 %v437, %v437
  %v478 = vpack.c.bf16 %v439, %v438
  %v479 = vpack.c.bf16 %v440, %v440
  %v480 = vpack.c.bf16 %v442, %v441
  %v481 = vpack.c.bf16 %v443, %v443
  %v482 = vpack.c.bf16 %v445, %v444
  %v483 = vpack.c.bf16 %v446, %v446
  %v484 = vpack.c.bf16 %v448, %v447
  %v485 = vpack.c.bf16 %v449, %v449
  %v486 = vpack.c.bf16 %v451, %v450
  %v487 = vpack.c.bf16 %v452, %v452
  %v488 = vpack.c.bf16 %v454, %v453
  %v489 = vpack.c.bf16 %v455, %v455
  %v490 = vpack.c.bf16 %v457, %v456
  %v491 = vpack.c.bf16 %v458, %v458
  %v492 = vpack.c.bf16 %v460, %v459
  %v493 = vpack.c.bf16 %v461, %v461
  %v494 = vld [vmem:[%s3] sm:$0xff]
  %vm495 = vcmask 195584
  %v497 = vsel %vm495, %v413, 0
  %vm499 = vcmask 1043456
  %v501 = vsel %vm499, %v463, 0
  %503 = vmatprep.subr.bf16.mxu0 0
  %504 = vmatpush1.bf16.msra.mxu0 0
  %505 = vmatprep.subr.bf16.mxu0 0
  %506 = vmatpush1.bf16.msra.mxu0 0
  %507 = vmatprep.subr.bf16.mxu0 0
  %508 = vmatpush1.bf16.msra.mxu0 0
  %509 = vmatprep.subr.bf16.mxu0 0
  %510 = vmatpush1.bf16.msra.mxu0 0
  %511 = vmatprep.subr.bf16.mxu0 0
  %512 = vmatpush1.bf16.msra.mxu0 0
  %513 = vmatprep.subr.bf16.mxu0 0
  %514 = vmatpush1.bf16.msra.mxu0 0
  %515 = vmatprep.subr.bf16.mxu0 0
  %516 = vmatpush1.bf16.msra.mxu0 %v501
  %517 = vmatprep.subr.bf16.mxu0 0
  %518 = vmatpush1.bf16.msra.mxu0 %v462
  %519 = vmatprep.subr.bf16.mxu0 0
  %520 = vmatpush2.bf16.msra.mxu0 0
  %521 = vmatprep.subr.bf16.mxu0 0
  %522 = vmatpush2.bf16.msra.mxu0 0
  %523 = vmatprep.subr.bf16.mxu0 0
  %524 = vmatpush2.bf16.msra.mxu0 0
  %525 = vmatprep.subr.bf16.mxu0 0
  %526 = vmatpush2.bf16.msra.mxu0 0
  %527 = vmatprep.subr.bf16.mxu0 0
  %528 = vmatpush2.bf16.msra.mxu0 0
  %529 = vmatprep.subr.bf16.mxu0 0
  %530 = vmatpush2.bf16.msra.mxu0 0
  %531 = vmatprep.subr.bf16.mxu0 0
  %532 = vmatpush2.bf16.msra.mxu0 0
  %533 = vmatprep.subr.bf16.mxu0 0
  %534 = vmatpush2.bf16.msra.mxu0 0
  %535 = vmatprep.mubr.bf16.mxu0 0
  %536 = vmatmul.mubr.bf16.gmra.mxu0 %v497
  %v537 = vpop.f32.mrf.mxu0
  %v538 = vadd.f32 %v494, %v537
  %v539 = vpop.f32.mrf.mxu0
  %v540 = vpop.f32.mrf.mxu0
  %v541 = vpop.f32.mrf.mxu0
  %542 = vdwg.mxu0
  %v544 = vsel %vm499, %v465, 0
  %546 = vmatprep.subr.bf16.mxu0 0
  %547 = vmatpush1.bf16.msra.mxu0 0
  %548 = vmatprep.subr.bf16.mxu0 0
  %549 = vmatpush1.bf16.msra.mxu0 0
  %550 = vmatprep.subr.bf16.mxu0 0
  %551 = vmatpush1.bf16.msra.mxu0 0
  %552 = vmatprep.subr.bf16.mxu0 0
  %553 = vmatpush1.bf16.msra.mxu0 0
  %554 = vmatprep.subr.bf16.mxu0 0
  %555 = vmatpush1.bf16.msra.mxu0 0
  %556 = vmatprep.subr.bf16.mxu0 0
  %557 = vmatpush1.bf16.msra.mxu0 0
  %558 = vmatprep.subr.bf16.mxu0 0
  %559 = vmatpush1.bf16.msra.mxu0 %v544
  %560 = vmatprep.subr.bf16.mxu0 0
  %561 = vmatpush1.bf16.msra.mxu0 %v464
  %562 = vmatprep.subr.bf16.mxu0 0
  %563 = vmatpush2.bf16.msra.mxu0 0
  %564 = vmatprep.subr.bf16.mxu0 0
  %565 = vmatpush2.bf16.msra.mxu0 0
  %566 = vmatprep.subr.bf16.mxu0 0
  %567 = vmatpush2.bf16.msra.mxu0 0
  %568 = vmatprep.subr.bf16.mxu0 0
  %569 = vmatpush2.bf16.msra.mxu0 0
  %570 = vmatprep.subr.bf16.mxu0 0
  %571 = vmatpush2.bf16.msra.mxu0 0
  %572 = vmatprep.subr.bf16.mxu0 0
  %573 = vmatpush2.bf16.msra.mxu0 0
  %574 = vmatprep.subr.bf16.mxu0 0
  %575 = vmatpush2.bf16.msra.mxu0 0
  %576 = vmatprep.subr.bf16.mxu0 0
  %577 = vmatpush2.bf16.msra.mxu0 0
  %578 = vmatprep.mubr.bf16.mxu0 0
  %579 = vmatmul.mubr.bf16.gmra.mxu0 %v497
  %v580 = vpop.f32.mrf.mxu0
  %v581 = vadd.f32 %v494, %v580
  %v582 = vpop.f32.mrf.mxu0
  %v583 = vpop.f32.mrf.mxu0
  %v584 = vpop.f32.mrf.mxu0
  %585 = vdwg.mxu0
  %v587 = vsel %vm499, %v467, 0
  %589 = vmatprep.subr.bf16.mxu0 0
  %590 = vmatpush1.bf16.msra.mxu0 0
  %591 = vmatprep.subr.bf16.mxu0 0
  %592 = vmatpush1.bf16.msra.mxu0 0
  %593 = vmatprep.subr.bf16.mxu0 0
  %594 = vmatpush1.bf16.msra.mxu0 0
  %595 = vmatprep.subr.bf16.mxu0 0
  %596 = vmatpush1.bf16.msra.mxu0 0
  %597 = vmatprep.subr.bf16.mxu0 0
  %598 = vmatpush1.bf16.msra.mxu0 0
  %599 = vmatprep.subr.bf16.mxu0 0
  %600 = vmatpush1.bf16.msra.mxu0 0
  %601 = vmatprep.subr.bf16.mxu0 0
  %602 = vmatpush1.bf16.msra.mxu0 %v587
  %603 = vmatprep.subr.bf16.mxu0 0
  %604 = vmatpush1.bf16.msra.mxu0 %v466
  %605 = vmatprep.subr.bf16.mxu0 0
  %606 = vmatpush2.bf16.msra.mxu0 0
  %607 = vmatprep.subr.bf16.mxu0 0
  %608 = vmatpush2.bf16.msra.mxu0 0
  %609 = vmatprep.subr.bf16.mxu0 0
  %610 = vmatpush2.bf16.msra.mxu0 0
  %611 = vmatprep.subr.bf16.mxu0 0
  %612 = vmatpush2.bf16.msra.mxu0 0
  %613 = vmatprep.subr.bf16.mxu0 0
  %614 = vmatpush2.bf16.msra.mxu0 0
  %615 = vmatprep.subr.bf16.mxu0 0
  %616 = vmatpush2.bf16.msra.mxu0 0
  %617 = vmatprep.subr.bf16.mxu0 0
  %618 = vmatpush2.bf16.msra.mxu0 0
  %619 = vmatprep.subr.bf16.mxu0 0
  %620 = vmatpush2.bf16.msra.mxu0 0
  %621 = vmatprep.mubr.bf16.mxu0 0
  %622 = vmatmul.mubr.bf16.gmra.mxu0 %v497
  %v623 = vpop.f32.mrf.mxu0
  %v624 = vadd.f32 %v494, %v623
  %v625 = vpop.f32.mrf.mxu0
  %v626 = vpop.f32.mrf.mxu0
  %v627 = vpop.f32.mrf.mxu0
  %628 = vdwg.mxu0
  %v630 = vsel %vm499, %v469, 0
  %632 = vmatprep.subr.bf16.mxu0 0
  %633 = vmatpush1.bf16.msra.mxu0 0
  %634 = vmatprep.subr.bf16.mxu0 0
  %635 = vmatpush1.bf16.msra.mxu0 0
  %636 = vmatprep.subr.bf16.mxu0 0
  %637 = vmatpush1.bf16.msra.mxu0 0
  %638 = vmatprep.subr.bf16.mxu0 0
  %639 = vmatpush1.bf16.msra.mxu0 0
  %640 = vmatprep.subr.bf16.mxu0 0
  %641 = vmatpush1.bf16.msra.mxu0 0
  %642 = vmatprep.subr.bf16.mxu0 0
  %643 = vmatpush1.bf16.msra.mxu0 0
  %644 = vmatprep.subr.bf16.mxu0 0
  %645 = vmatpush1.bf16.msra.mxu0 %v630
  %646 = vmatprep.subr.bf16.mxu0 0
  %647 = vmatpush1.bf16.msra.mxu0 %v468
  %648 = vmatprep.subr.bf16.mxu0 0
  %649 = vmatpush2.bf16.msra.mxu0 0
  %650 = vmatprep.subr.bf16.mxu0 0
  %651 = vmatpush2.bf16.msra.mxu0 0
  %652 = vmatprep.subr.bf16.mxu0 0
  %653 = vmatpush2.bf16.msra.mxu0 0
  %654 = vmatprep.subr.bf16.mxu0 0
  %655 = vmatpush2.bf16.msra.mxu0 0
  %656 = vmatprep.subr.bf16.mxu0 0
  %657 = vmatpush2.bf16.msra.mxu0 0
  %658 = vmatprep.subr.bf16.mxu0 0
  %659 = vmatpush2.bf16.msra.mxu0 0
  %660 = vmatprep.subr.bf16.mxu0 0
  %661 = vmatpush2.bf16.msra.mxu0 0
  %662 = vmatprep.subr.bf16.mxu0 0
  %663 = vmatpush2.bf16.msra.mxu0 0
  %664 = vmatprep.mubr.bf16.mxu0 0
  %665 = vmatmul.mubr.bf16.gmra.mxu0 %v497
  %v666 = vpop.f32.mrf.mxu0
  %v667 = vadd.f32 %v494, %v666
  %v668 = vpop.f32.mrf.mxu0
  %v669 = vpop.f32.mrf.mxu0
  %v670 = vpop.f32.mrf.mxu0
  %671 = vdwg.mxu0
  %v673 = vsel %vm499, %v471, 0
  %675 = vmatprep.subr.bf16.mxu0 0
  %676 = vmatpush1.bf16.msra.mxu0 0
  %677 = vmatprep.subr.bf16.mxu0 0
  %678 = vmatpush1.bf16.msra.mxu0 0
  %679 = vmatprep.subr.bf16.mxu0 0
  %680 = vmatpush1.bf16.msra.mxu0 0
  %681 = vmatprep.subr.bf16.mxu0 0
  %682 = vmatpush1.bf16.msra.mxu0 0
  %683 = vmatprep.subr.bf16.mxu0 0
  %684 = vmatpush1.bf16.msra.mxu0 0
  %685 = vmatprep.subr.bf16.mxu0 0
  %686 = vmatpush1.bf16.msra.mxu0 0
  %687 = vmatprep.subr.bf16.mxu0 0
  %688 = vmatpush1.bf16.msra.mxu0 %v673
  %689 = vmatprep.subr.bf16.mxu0 0
  %690 = vmatpush1.bf16.msra.mxu0 %v470
  %691 = vmatprep.subr.bf16.mxu0 0
  %692 = vmatpush2.bf16.msra.mxu0 0
  %693 = vmatprep.subr.bf16.mxu0 0
  %694 = vmatpush2.bf16.msra.mxu0 0
  %695 = vmatprep.subr.bf16.mxu0 0
  %696 = vmatpush2.bf16.msra.mxu0 0
  %697 = vmatprep.subr.bf16.mxu0 0
  %698 = vmatpush2.bf16.msra.mxu0 0
  %699 = vmatprep.subr.bf16.mxu0 0
  %700 = vmatpush2.bf16.msra.mxu0 0
  %701 = vmatprep.subr.bf16.mxu0 0
  %702 = vmatpush2.bf16.msra.mxu0 0
  %703 = vmatprep.subr.bf16.mxu0 0
  %704 = vmatpush2.bf16.msra.mxu0 0
  %705 = vmatprep.subr.bf16.mxu0 0
  %706 = vmatpush2.bf16.msra.mxu0 0
  %707 = vmatprep.mubr.bf16.mxu0 0
  %708 = vmatmul.mubr.bf16.gmra.mxu0 %v497
  %v709 = vpop.f32.mrf.mxu0
  %v710 = vadd.f32 %v494, %v709
  %v711 = vpop.f32.mrf.mxu0
  %v712 = vpop.f32.mrf.mxu0
  %v713 = vpop.f32.mrf.mxu0
  %714 = vdwg.mxu0
  %v716 = vsel %vm499, %v473, 0
  %718 = vmatprep.subr.bf16.mxu0 0
  %719 = vmatpush1.bf16.msra.mxu0 0
  %720 = vmatprep.subr.bf16.mxu0 0
  %721 = vmatpush1.bf16.msra.mxu0 0
  %722 = vmatprep.subr.bf16.mxu0 0
  %723 = vmatpush1.bf16.msra.mxu0 0
  %724 = vmatprep.subr.bf16.mxu0 0
  %725 = vmatpush1.bf16.msra.mxu0 0
  %726 = vmatprep.subr.bf16.mxu0 0
  %727 = vmatpush1.bf16.msra.mxu0 0
  %728 = vmatprep.subr.bf16.mxu0 0
  %729 = vmatpush1.bf16.msra.mxu0 0
  %730 = vmatprep.subr.bf16.mxu0 0
  %731 = vmatpush1.bf16.msra.mxu0 %v716
  %732 = vmatprep.subr.bf16.mxu0 0
  %733 = vmatpush1.bf16.msra.mxu0 %v472
  %734 = vmatprep.subr.bf16.mxu0 0
  %735 = vmatpush2.bf16.msra.mxu0 0
  %736 = vmatprep.subr.bf16.mxu0 0
  %737 = vmatpush2.bf16.msra.mxu0 0
  %738 = vmatprep.subr.bf16.mxu0 0
  %739 = vmatpush2.bf16.msra.mxu0 0
  %740 = vmatprep.subr.bf16.mxu0 0
  %741 = vmatpush2.bf16.msra.mxu0 0
  %742 = vmatprep.subr.bf16.mxu0 0
  %743 = vmatpush2.bf16.msra.mxu0 0
  %744 = vmatprep.subr.bf16.mxu0 0
  %745 = vmatpush2.bf16.msra.mxu0 0
  %746 = vmatprep.subr.bf16.mxu0 0
  %747 = vmatpush2.bf16.msra.mxu0 0
  %748 = vmatprep.subr.bf16.mxu0 0
  %749 = vmatpush2.bf16.msra.mxu0 0
  %750 = vmatprep.mubr.bf16.mxu0 0
  %751 = vmatmul.mubr.bf16.gmra.mxu0 %v497
  %v752 = vpop.f32.mrf.mxu0
  %v753 = vadd.f32 %v494, %v752
  %v754 = vpop.f32.mrf.mxu0
  %v755 = vpop.f32.mrf.mxu0
  %v756 = vpop.f32.mrf.mxu0
  %757 = vdwg.mxu0
  %v759 = vsel %vm499, %v475, 0
  %761 = vmatprep.subr.bf16.mxu0 0
  %762 = vmatpush1.bf16.msra.mxu0 0
  %763 = vmatprep.subr.bf16.mxu0 0
  %764 = vmatpush1.bf16.msra.mxu0 0
  %765 = vmatprep.subr.bf16.mxu0 0
  %766 = vmatpush1.bf16.msra.mxu0 0
  %767 = vmatprep.subr.bf16.mxu0 0
  %768 = vmatpush1.bf16.msra.mxu0 0
  %769 = vmatprep.subr.bf16.mxu0 0
  %770 = vmatpush1.bf16.msra.mxu0 0
  %771 = vmatprep.subr.bf16.mxu0 0
  %772 = vmatpush1.bf16.msra.mxu0 0
  %773 = vmatprep.subr.bf16.mxu0 0
  %774 = vmatpush1.bf16.msra.mxu0 %v759
  %775 = vmatprep.subr.bf16.mxu0 0
  %776 = vmatpush1.bf16.msra.mxu0 %v474
  %777 = vmatprep.subr.bf16.mxu0 0
  %778 = vmatpush2.bf16.msra.mxu0 0
  %779 = vmatprep.subr.bf16.mxu0 0
  %780 = vmatpush2.bf16.msra.mxu0 0
  %781 = vmatprep.subr.bf16.mxu0 0
  %782 = vmatpush2.bf16.msra.mxu0 0
  %783 = vmatprep.subr.bf16.mxu0 0
  %784 = vmatpush2.bf16.msra.mxu0 0
  %785 = vmatprep.subr.bf16.mxu0 0
  %786 = vmatpush2.bf16.msra.mxu0 0
  %787 = vmatprep.subr.bf16.mxu0 0
  %788 = vmatpush2.bf16.msra.mxu0 0
  %789 = vmatprep.subr.bf16.mxu0 0
  %790 = vmatpush2.bf16.msra.mxu0 0
  %791 = vmatprep.subr.bf16.mxu0 0
  %792 = vmatpush2.bf16.msra.mxu0 0
  %793 = vmatprep.mubr.bf16.mxu0 0
  %794 = vmatmul.mubr.bf16.gmra.mxu0 %v497
  %v795 = vpop.f32.mrf.mxu0
  %v796 = vadd.f32 %v494, %v795
  %v797 = vpop.f32.mrf.mxu0
  %v798 = vpop.f32.mrf.mxu0
  %v799 = vpop.f32.mrf.mxu0
  %800 = vdwg.mxu0
  %v802 = vsel %vm499, %v477, 0
  %804 = vmatprep.subr.bf16.mxu0 0
  %805 = vmatpush1.bf16.msra.mxu0 0
  %806 = vmatprep.subr.bf16.mxu0 0
  %807 = vmatpush1.bf16.msra.mxu0 0
  %808 = vmatprep.subr.bf16.mxu0 0
  %809 = vmatpush1.bf16.msra.mxu0 0
  %810 = vmatprep.subr.bf16.mxu0 0
  %811 = vmatpush1.bf16.msra.mxu0 0
  %812 = vmatprep.subr.bf16.mxu0 0
  %813 = vmatpush1.bf16.msra.mxu0 0
  %814 = vmatprep.subr.bf16.mxu0 0
  %815 = vmatpush1.bf16.msra.mxu0 0
  %816 = vmatprep.subr.bf16.mxu0 0
  %817 = vmatpush1.bf16.msra.mxu0 %v802
  %818 = vmatprep.subr.bf16.mxu0 0
  %819 = vmatpush1.bf16.msra.mxu0 %v476
  %820 = vmatprep.subr.bf16.mxu0 0
  %821 = vmatpush2.bf16.msra.mxu0 0
  %822 = vmatprep.subr.bf16.mxu0 0
  %823 = vmatpush2.bf16.msra.mxu0 0
  %824 = vmatprep.subr.bf16.mxu0 0
  %825 = vmatpush2.bf16.msra.mxu0 0
  %826 = vmatprep.subr.bf16.mxu0 0
  %827 = vmatpush2.bf16.msra.mxu0 0
  %828 = vmatprep.subr.bf16.mxu0 0
  %829 = vmatpush2.bf16.msra.mxu0 0
  %830 = vmatprep.subr.bf16.mxu0 0
  %831 = vmatpush2.bf16.msra.mxu0 0
  %832 = vmatprep.subr.bf16.mxu0 0
  %833 = vmatpush2.bf16.msra.mxu0 0
  %834 = vmatprep.subr.bf16.mxu0 0
  %835 = vmatpush2.bf16.msra.mxu0 0
  %836 = vmatprep.mubr.bf16.mxu0 0
  %837 = vmatmul.mubr.bf16.gmra.mxu0 %v497
  %v838 = vpop.f32.mrf.mxu0
  %v839 = vadd.f32 %v494, %v838
  %v840 = vpop.f32.mrf.mxu0
  %v841 = vpop.f32.mrf.mxu0
  %v842 = vpop.f32.mrf.mxu0
  %843 = vdwg.mxu0
  %v845 = vsel %vm499, %v479, 0
  %847 = vmatprep.subr.bf16.mxu0 0
  %848 = vmatpush1.bf16.msra.mxu0 0
  %849 = vmatprep.subr.bf16.mxu0 0
  %850 = vmatpush1.bf16.msra.mxu0 0
  %851 = vmatprep.subr.bf16.mxu0 0
  %852 = vmatpush1.bf16.msra.mxu0 0
  %853 = vmatprep.subr.bf16.mxu0 0
  %854 = vmatpush1.bf16.msra.mxu0 0
  %855 = vmatprep.subr.bf16.mxu0 0
  %856 = vmatpush1.bf16.msra.mxu0 0
  %857 = vmatprep.subr.bf16.mxu0 0
  %858 = vmatpush1.bf16.msra.mxu0 0
  %859 = vmatprep.subr.bf16.mxu0 0
  %860 = vmatpush1.bf16.msra.mxu0 %v845
  %861 = vmatprep.subr.bf16.mxu0 0
  %862 = vmatpush1.bf16.msra.mxu0 %v478
  %863 = vmatprep.subr.bf16.mxu0 0
  %864 = vmatpush2.bf16.msra.mxu0 0
  %865 = vmatprep.subr.bf16.mxu0 0
  %866 = vmatpush2.bf16.msra.mxu0 0
  %867 = vmatprep.subr.bf16.mxu0 0
  %868 = vmatpush2.bf16.msra.mxu0 0
  %869 = vmatprep.subr.bf16.mxu0 0
  %870 = vmatpush2.bf16.msra.mxu0 0
  %871 = vmatprep.subr.bf16.mxu0 0
  %872 = vmatpush2.bf16.msra.mxu0 0
  %873 = vmatprep.subr.bf16.mxu0 0
  %874 = vmatpush2.bf16.msra.mxu0 0
  %875 = vmatprep.subr.bf16.mxu0 0
  %876 = vmatpush2.bf16.msra.mxu0 0
  %877 = vmatprep.subr.bf16.mxu0 0
  %878 = vmatpush2.bf16.msra.mxu0 0
  %879 = vmatprep.mubr.bf16.mxu0 0
  %880 = vmatmul.mubr.bf16.gmra.mxu0 %v497
  %v881 = vpop.f32.mrf.mxu0
  %v882 = vadd.f32 %v494, %v881
  %v883 = vpop.f32.mrf.mxu0
  %v884 = vpop.f32.mrf.mxu0
  %v885 = vpop.f32.mrf.mxu0
  %886 = vdwg.mxu0
  %v888 = vsel %vm499, %v481, 0
  %890 = vmatprep.subr.bf16.mxu0 0
  %891 = vmatpush1.bf16.msra.mxu0 0
  %892 = vmatprep.subr.bf16.mxu0 0
  %893 = vmatpush1.bf16.msra.mxu0 0
  %894 = vmatprep.subr.bf16.mxu0 0
  %895 = vmatpush1.bf16.msra.mxu0 0
  %896 = vmatprep.subr.bf16.mxu0 0
  %897 = vmatpush1.bf16.msra.mxu0 0
  %898 = vmatprep.subr.bf16.mxu0 0
  %899 = vmatpush1.bf16.msra.mxu0 0
  %900 = vmatprep.subr.bf16.mxu0 0
  %901 = vmatpush1.bf16.msra.mxu0 0
  %902 = vmatprep.subr.bf16.mxu0 0
  %903 = vmatpush1.bf16.msra.mxu0 %v888
  %904 = vmatprep.subr.bf16.mxu0 0
  %905 = vmatpush1.bf16.msra.mxu0 %v480
  %906 = vmatprep.subr.bf16.mxu0 0
  %907 = vmatpush2.bf16.msra.mxu0 0
  %908 = vmatprep.subr.bf16.mxu0 0
  %909 = vmatpush2.bf16.msra.mxu0 0
  %910 = vmatprep.subr.bf16.mxu0 0
  %911 = vmatpush2.bf16.msra.mxu0 0
  %912 = vmatprep.subr.bf16.mxu0 0
  %913 = vmatpush2.bf16.msra.mxu0 0
  %914 = vmatprep.subr.bf16.mxu0 0
  %915 = vmatpush2.bf16.msra.mxu0 0
  %916 = vmatprep.subr.bf16.mxu0 0
  %917 = vmatpush2.bf16.msra.mxu0 0
  %918 = vmatprep.subr.bf16.mxu0 0
  %919 = vmatpush2.bf16.msra.mxu0 0
  %920 = vmatprep.subr.bf16.mxu0 0
  %921 = vmatpush2.bf16.msra.mxu0 0
  %922 = vmatprep.mubr.bf16.mxu0 0
  %923 = vmatmul.mubr.bf16.gmra.mxu0 %v497
  %v924 = vpop.f32.mrf.mxu0
  %v925 = vadd.f32 %v494, %v924
  %v926 = vpop.f32.mrf.mxu0
  %v927 = vpop.f32.mrf.mxu0
  %v928 = vpop.f32.mrf.mxu0
  %929 = vdwg.mxu0
  %v931 = vsel %vm499, %v483, 0
  %933 = vmatprep.subr.bf16.mxu0 0
  %934 = vmatpush1.bf16.msra.mxu0 0
  %935 = vmatprep.subr.bf16.mxu0 0
  %936 = vmatpush1.bf16.msra.mxu0 0
  %937 = vmatprep.subr.bf16.mxu0 0
  %938 = vmatpush1.bf16.msra.mxu0 0
  %939 = vmatprep.subr.bf16.mxu0 0
  %940 = vmatpush1.bf16.msra.mxu0 0
  %941 = vmatprep.subr.bf16.mxu0 0
  %942 = vmatpush1.bf16.msra.mxu0 0
  %943 = vmatprep.subr.bf16.mxu0 0
  %944 = vmatpush1.bf16.msra.mxu0 0
  %945 = vmatprep.subr.bf16.mxu0 0
  %946 = vmatpush1.bf16.msra.mxu0 %v931
  %947 = vmatprep.subr.bf16.mxu0 0
  %948 = vmatpush1.bf16.msra.mxu0 %v482
  %949 = vmatprep.subr.bf16.mxu0 0
  %950 = vmatpush2.bf16.msra.mxu0 0
  %951 = vmatprep.subr.bf16.mxu0 0
  %952 = vmatpush2.bf16.msra.mxu0 0
  %953 = vmatprep.subr.bf16.mxu0 0
  %954 = vmatpush2.bf16.msra.mxu0 0
  %955 = vmatprep.subr.bf16.mxu0 0
  %956 = vmatpush2.bf16.msra.mxu0 0
  %957 = vmatprep.subr.bf16.mxu0 0
  %958 = vmatpush2.bf16.msra.mxu0 0
  %959 = vmatprep.subr.bf16.mxu0 0
  %960 = vmatpush2.bf16.msra.mxu0 0
  %961 = vmatprep.subr.bf16.mxu0 0
  %962 = vmatpush2.bf16.msra.mxu0 0
  %963 = vmatprep.subr.bf16.mxu0 0
  %964 = vmatpush2.bf16.msra.mxu0 0
  %965 = vmatprep.mubr.bf16.mxu0 0
  %966 = vmatmul.mubr.bf16.gmra.mxu0 %v497
  %v967 = vpop.f32.mrf.mxu0
  %v968 = vadd.f32 %v494, %v967
  %v969 = vpop.f32.mrf.mxu0
  %v970 = vpop.f32.mrf.mxu0
  %v971 = vpop.f32.mrf.mxu0
  %972 = vdwg.mxu0
  %v974 = vsel %vm499, %v485, 0
  %976 = vmatprep.subr.bf16.mxu0 0
  %977 = vmatpush1.bf16.msra.mxu0 0
  %978 = vmatprep.subr.bf16.mxu0 0
  %979 = vmatpush1.bf16.msra.mxu0 0
  %980 = vmatprep.subr.bf16.mxu0 0
  %981 = vmatpush1.bf16.msra.mxu0 0
  %982 = vmatprep.subr.bf16.mxu0 0
  %983 = vmatpush1.bf16.msra.mxu0 0
  %984 = vmatprep.subr.bf16.mxu0 0
  %985 = vmatpush1.bf16.msra.mxu0 0
  %986 = vmatprep.subr.bf16.mxu0 0
  %987 = vmatpush1.bf16.msra.mxu0 0
  %988 = vmatprep.subr.bf16.mxu0 0
  %989 = vmatpush1.bf16.msra.mxu0 %v974
  %990 = vmatprep.subr.bf16.mxu0 0
  %991 = vmatpush1.bf16.msra.mxu0 %v484
  %992 = vmatprep.subr.bf16.mxu0 0
  %993 = vmatpush2.bf16.msra.mxu0 0
  %994 = vmatprep.subr.bf16.mxu0 0
  %995 = vmatpush2.bf16.msra.mxu0 0
  %996 = vmatprep.subr.bf16.mxu0 0
  %997 = vmatpush2.bf16.msra.mxu0 0
  %998 = vmatprep.subr.bf16.mxu0 0
  %999 = vmatpush2.bf16.msra.mxu0 0
  %1000 = vmatprep.subr.bf16.mxu0 0
  %1001 = vmatpush2.bf16.msra.mxu0 0
  %1002 = vmatprep.subr.bf16.mxu0 0
  %1003 = vmatpush2.bf16.msra.mxu0 0
  %1004 = vmatprep.subr.bf16.mxu0 0
  %1005 = vmatpush2.bf16.msra.mxu0 0
  %1006 = vmatprep.subr.bf16.mxu0 0
  %1007 = vmatpush2.bf16.msra.mxu0 0
  %1008 = vmatprep.mubr.bf16.mxu0 0
  %1009 = vmatmul.mubr.bf16.gmra.mxu0 %v497
  %v1010 = vpop.f32.mrf.mxu0
  %v1011 = vadd.f32 %v494, %v1010
  %v1012 = vpop.f32.mrf.mxu0
  %v1013 = vpop.f32.mrf.mxu0
  %v1014 = vpop.f32.mrf.mxu0
  %1015 = vdwg.mxu0
  %v1017 = vsel %vm499, %v487, 0
  %1019 = vmatprep.subr.bf16.mxu0 0
  %1020 = vmatpush1.bf16.msra.mxu0 0
  %1021 = vmatprep.subr.bf16.mxu0 0
  %1022 = vmatpush1.bf16.msra.mxu0 0
  %1023 = vmatprep.subr.bf16.mxu0 0
  %1024 = vmatpush1.bf16.msra.mxu0 0
  %1025 = vmatprep.subr.bf16.mxu0 0
  %1026 = vmatpush1.bf16.msra.mxu0 0
  %1027 = vmatprep.subr.bf16.mxu0 0
  %1028 = vmatpush1.bf16.msra.mxu0 0
  %1029 = vmatprep.subr.bf16.mxu0 0
  %1030 = vmatpush1.bf16.msra.mxu0 0
  %1031 = vmatprep.subr.bf16.mxu0 0
  %1032 = vmatpush1.bf16.msra.mxu0 %v1017
  %1033 = vmatprep.subr.bf16.mxu0 0
  %1034 = vmatpush1.bf16.msra.mxu0 %v486
  %1035 = vmatprep.subr.bf16.mxu0 0
  %1036 = vmatpush2.bf16.msra.mxu0 0
  %1037 = vmatprep.subr.bf16.mxu0 0
  %1038 = vmatpush2.bf16.msra.mxu0 0
  %1039 = vmatprep.subr.bf16.mxu0 0
  %1040 = vmatpush2.bf16.msra.mxu0 0
  %1041 = vmatprep.subr.bf16.mxu0 0
  %1042 = vmatpush2.bf16.msra.mxu0 0
  %1043 = vmatprep.subr.bf16.mxu0 0
  %1044 = vmatpush2.bf16.msra.mxu0 0
  %1045 = vmatprep.subr.bf16.mxu0 0
  %1046 = vmatpush2.bf16.msra.mxu0 0
  %1047 = vmatprep.subr.bf16.mxu0 0
  %1048 = vmatpush2.bf16.msra.mxu0 0
  %1049 = vmatprep.subr.bf16.mxu0 0
  %1050 = vmatpush2.bf16.msra.mxu0 0
  %1051 = vmatprep.mubr.bf16.mxu0 0
  %1052 = vmatmul.mubr.bf16.gmra.mxu0 %v497
  %v1053 = vpop.f32.mrf.mxu0
  %v1054 = vadd.f32 %v494, %v1053
  %v1055 = vpop.f32.mrf.mxu0
  %v1056 = vpop.f32.mrf.mxu0
  %v1057 = vpop.f32.mrf.mxu0
  %1058 = vdwg.mxu0
  %v1060 = vsel %vm499, %v489, 0
  %1062 = vmatprep.subr.bf16.mxu0 0
  %1063 = vmatpush1.bf16.msra.mxu0 0
  %1064 = vmatprep.subr.bf16.mxu0 0
  %1065 = vmatpush1.bf16.msra.mxu0 0
  %1066 = vmatprep.subr.bf16.mxu0 0
  %1067 = vmatpush1.bf16.msra.mxu0 0
  %1068 = vmatprep.subr.bf16.mxu0 0
  %1069 = vmatpush1.bf16.msra.mxu0 0
  %1070 = vmatprep.subr.bf16.mxu0 0
  %1071 = vmatpush1.bf16.msra.mxu0 0
  %1072 = vmatprep.subr.bf16.mxu0 0
  %1073 = vmatpush1.bf16.msra.mxu0 0
  %1074 = vmatprep.subr.bf16.mxu0 0
  %1075 = vmatpush1.bf16.msra.mxu0 %v1060
  %1076 = vmatprep.subr.bf16.mxu0 0
  %1077 = vmatpush1.bf16.msra.mxu0 %v488
  %1078 = vmatprep.subr.bf16.mxu0 0
  %1079 = vmatpush2.bf16.msra.mxu0 0
  %1080 = vmatprep.subr.bf16.mxu0 0
  %1081 = vmatpush2.bf16.msra.mxu0 0
  %1082 = vmatprep.subr.bf16.mxu0 0
  %1083 = vmatpush2.bf16.msra.mxu0 0
  %1084 = vmatprep.subr.bf16.mxu0 0
  %1085 = vmatpush2.bf16.msra.mxu0 0
  %1086 = vmatprep.subr.bf16.mxu0 0
  %1087 = vmatpush2.bf16.msra.mxu0 0
  %1088 = vmatprep.subr.bf16.mxu0 0
  %1089 = vmatpush2.bf16.msra.mxu0 0
  %1090 = vmatprep.subr.bf16.mxu0 0
  %1091 = vmatpush2.bf16.msra.mxu0 0
  %1092 = vmatprep.subr.bf16.mxu0 0
  %1093 = vmatpush2.bf16.msra.mxu0 0
  %1094 = vmatprep.mubr.bf16.mxu0 0
  %1095 = vmatmul.mubr.bf16.gmra.mxu0 %v497
  %v1096 = vpop.f32.mrf.mxu0
  %v1097 = vadd.f32 %v494, %v1096
  %v1098 = vpop.f32.mrf.mxu0
  %v1099 = vpop.f32.mrf.mxu0
  %v1100 = vpop.f32.mrf.mxu0
  %1101 = vdwg.mxu0
  %v1103 = vsel %vm499, %v491, 0
  %1105 = vmatprep.subr.bf16.mxu0 0
  %1106 = vmatpush1.bf16.msra.mxu0 0
  %1107 = vmatprep.subr.bf16.mxu0 0
  %1108 = vmatpush1.bf16.msra.mxu0 0
  %1109 = vmatprep.subr.bf16.mxu0 0
  %1110 = vmatpush1.bf16.msra.mxu0 0
  %1111 = vmatprep.subr.bf16.mxu0 0
  %1112 = vmatpush1.bf16.msra.mxu0 0
  %1113 = vmatprep.subr.bf16.mxu0 0
  %1114 = vmatpush1.bf16.msra.mxu0 0
  %1115 = vmatprep.subr.bf16.mxu0 0
  %1116 = vmatpush1.bf16.msra.mxu0 0
  %1117 = vmatprep.subr.bf16.mxu0 0
  %1118 = vmatpush1.bf16.msra.mxu0 %v1103
  %1119 = vmatprep.subr.bf16.mxu0 0
  %1120 = vmatpush1.bf16.msra.mxu0 %v490
  %1121 = vmatprep.subr.bf16.mxu0 0
  %1122 = vmatpush2.bf16.msra.mxu0 0
  %1123 = vmatprep.subr.bf16.mxu0 0
  %1124 = vmatpush2.bf16.msra.mxu0 0
  %1125 = vmatprep.subr.bf16.mxu0 0
  %1126 = vmatpush2.bf16.msra.mxu0 0
  %1127 = vmatprep.subr.bf16.mxu0 0
  %1128 = vmatpush2.bf16.msra.mxu0 0
  %1129 = vmatprep.subr.bf16.mxu0 0
  %1130 = vmatpush2.bf16.msra.mxu0 0
  %1131 = vmatprep.subr.bf16.mxu0 0
  %1132 = vmatpush2.bf16.msra.mxu0 0
  %1133 = vmatprep.subr.bf16.mxu0 0
  %1134 = vmatpush2.bf16.msra.mxu0 0
  %1135 = vmatprep.subr.bf16.mxu0 0
  %1136 = vmatpush2.bf16.msra.mxu0 0
  %1137 = vmatprep.mubr.bf16.mxu0 0
  %1138 = vmatmul.mubr.bf16.gmra.mxu0 %v497
  %v1139 = vpop.f32.mrf.mxu0
  %v1140 = vadd.f32 %v494, %v1139
  %v1141 = vpop.f32.mrf.mxu0
  %v1142 = vpop.f32.mrf.mxu0
  %v1143 = vpop.f32.mrf.mxu0
  %1144 = vdwg.mxu0
  %v1146 = vsel %vm499, %v493, 0
  %1148 = vmatprep.subr.bf16.mxu0 0
  %1149 = vmatpush1.bf16.msra.mxu0 0
  %1150 = vmatprep.subr.bf16.mxu0 0
  %1151 = vmatpush1.bf16.msra.mxu0 0
  %1152 = vmatprep.subr.bf16.mxu0 0
  %1153 = vmatpush1.bf16.msra.mxu0 0
  %1154 = vmatprep.subr.bf16.mxu0 0
  %1155 = vmatpush1.bf16.msra.mxu0 0
  %1156 = vmatprep.subr.bf16.mxu0 0
  %1157 = vmatpush1.bf16.msra.mxu0 0
  %1158 = vmatprep.subr.bf16.mxu0 0
  %1159 = vmatpush1.bf16.msra.mxu0 0
  %1160 = vmatprep.subr.bf16.mxu0 0
  %1161 = vmatpush1.bf16.msra.mxu0 %v1146
  %1162 = vmatprep.subr.bf16.mxu0 0
  %1163 = vmatpush1.bf16.msra.mxu0 %v492
  %1164 = vmatprep.subr.bf16.mxu0 0
  %1165 = vmatpush2.bf16.msra.mxu0 0
  %1166 = vmatprep.subr.bf16.mxu0 0
  %1167 = vmatpush2.bf16.msra.mxu0 0
  %1168 = vmatprep.subr.bf16.mxu0 0
  %1169 = vmatpush2.bf16.msra.mxu0 0
  %1170 = vmatprep.subr.bf16.mxu0 0
  %1171 = vmatpush2.bf16.msra.mxu0 0
  %1172 = vmatprep.subr.bf16.mxu0 0
  %1173 = vmatpush2.bf16.msra.mxu0 0
  %1174 = vmatprep.subr.bf16.mxu0 0
  %1175 = vmatpush2.bf16.msra.mxu0 0
  %1176 = vmatprep.subr.bf16.mxu0 0
  %1177 = vmatpush2.bf16.msra.mxu0 0
  %1178 = vmatprep.subr.bf16.mxu0 0
  %1179 = vmatpush2.bf16.msra.mxu0 0
  %1180 = vmatprep.mubr.bf16.mxu0 0
  %1181 = vmatmul.mubr.bf16.gmra.mxu0 %v497
  %v1182 = vpop.f32.mrf.mxu0
  %v1183 = vadd.f32 %v494, %v1182
  %v1184 = vpop.f32.mrf.mxu0
  %v1185 = vpop.f32.mrf.mxu0
  %v1186 = vpop.f32.mrf.mxu0
  %1187 = vdwg.mxu0
  %v1188 = vadd.f32 %v538, %v20
  %v1189 = vadd.f32 %v581, %v21
  %v1190 = vadd.f32 %v624, %v22
  %v1191 = vadd.f32 %v667, %v23
  %v1192 = vadd.f32 %v710, %v24
  %v1193 = vadd.f32 %v753, %v25
  %v1194 = vadd.f32 %v796, %v26
  %v1195 = vadd.f32 %v839, %v27
  %v1196 = vadd.f32 %v882, %v28
  %v1197 = vadd.f32 %v925, %v29
  %v1198 = vadd.f32 %v968, %v30
  %v1199 = vadd.f32 %v1011, %v31
  %v1200 = vadd.f32 %v1054, %v32
  %v1201 = vadd.f32 %v1097, %v33
  %v1202 = vadd.f32 %v1140, %v34
  %v1203 = vadd.f32 %v1183, %v35
  %1204 = vst.msk [vmem:[%s4] sm:$0xff] %vm36, %v1188
  %1205 = vst.msk [vmem:[%s4 + $0x8] sm:$0xff] %vm36, %v1189
  %1206 = vst.msk [vmem:[%s4 + $0x10] sm:$0xff] %vm36, %v1190
  %1207 = vst.msk [vmem:[%s4 + $0x18] sm:$0xff] %vm36, %v1191
  %1208 = vst.msk [vmem:[%s4 + $0x20] sm:$0xff] %vm36, %v1192
  %1209 = vst.msk [vmem:[%s4 + $0x28] sm:$0xff] %vm36, %v1193
  %1210 = vst.msk [vmem:[%s4 + $0x30] sm:$0xff] %vm36, %v1194
  %1211 = vst.msk [vmem:[%s4 + $0x38] sm:$0xff] %vm36, %v1195
  %1212 = vst.msk [vmem:[%s4 + $0x40] sm:$0xff] %vm36, %v1196
  %1213 = vst.msk [vmem:[%s4 + $0x48] sm:$0xff] %vm36, %v1197
  %1214 = vst.msk [vmem:[%s4 + $0x50] sm:$0xff] %vm36, %v1198
  %1215 = vst.msk [vmem:[%s4 + $0x58] sm:$0xff] %vm36, %v1199
  %1216 = vst.msk [vmem:[%s4 + $0x60] sm:$0xff] %vm36, %v1200
  %1217 = vst.msk [vmem:[%s4 + $0x68] sm:$0xff] %vm36, %v1201
  %1218 = vst.msk [vmem:[%s4 + $0x70] sm:$0xff] %vm36, %v1202
  %1219 = vst.msk [vmem:[%s4 + $0x78] sm:$0xff] %vm36, %v1203
  // Predicated region
  $region18: #{graph_conv_layer_forward.1} parent=0 // pred_check
    _
  $region19: #{graph_conv_layer_forward.1} parent=0 // pred_check_branch
    %1221 = sbr.rel (0) target = $region21
  $region20: #{graph_conv_layer_forward.1} parent=0 // pred_region
    _
  $region21: #{graph_conv_layer_forward.1} parent=0 // pred_fallthru
    _
  // Predicated region
  $region22: #{graph_conv_layer_forward.1} parent=0 // pred_check
    _
  $region23: #{graph_conv_layer_forward.1} parent=0 // pred_check_branch
    %1223 = sbr.rel (0) target = $region25
  $region24: #{graph_conv_layer_forward.1} parent=0 // pred_region
    _
  $region25: #{graph_conv_layer_forward.1} parent=0 // pred_fallthru
    _

</llo_original>
